<compile_context>
chip_gen: v7x
topology: tpu7x:2x2x1
jax: 0.10.0
libtpu: 0.0.40
codegen_flags: <defaults>
</compile_context>

<pallas_src>
import jax
import jax.numpy as jnp
from jax.experimental import pallas as pl
from jax.experimental.pallas import tpu as pltpu

N_PAD = 128  # lane-dense padded width for the final layer


def _round_up(n, m):
    return ((n + m - 1) // m) * m


def mlp_kernel(x_ref, w0_ref, b0_ref, w1_ref, b1_ref, w2_ref, b2_ref, o_ref):
    # layer_0: (B,2) -> (B,64).  K=2, so skip the MXU and do two broadcast FMAs
    # on the VPU: x[:,0:1]*w0[0,:] + x[:,1:2]*w0[1,:] + b0, then ReLU.
    x = x_ref[...]
    h0 = (x[:, 0:1] * w0_ref[0:1, :]
          + x[:, 1:2] * w0_ref[1:2, :]
          + b0_ref[...])
    h0 = jnp.maximum(h0, 0.0)

    # layer_1: (B,64) @ (64,512) -> ReLU.  Dominant matmul: bf16 operands,
    # f32 accumulation (native MXU path); elementwise stays f32.
    h1 = jnp.dot(h0.astype(jnp.bfloat16), w1_ref[...].astype(jnp.bfloat16),
                 preferred_element_type=jnp.float32)
    h1 = jnp.maximum(h1 + b1_ref[...], 0.0)

    # layer_2: (B,512) @ (512,128) + (1,128) — lane-dense padded output,
    # full-vreg unmasked store.
    out = jnp.dot(h1, w2_ref[...], preferred_element_type=jnp.float32)
    o_ref[...] = (out + b2_ref[...]).astype(o_ref.dtype)


def mlp_forward(x, params, tile_b=512):
    w0, b0, w1, b1, w2, b2 = params
    B = x.shape[0]
    n_out = w2.shape[1]

    # Pad the final layer to a lane-dense N=128 (zeros in the padded columns).
    w2p = jnp.zeros((w2.shape[0], N_PAD), w2.dtype).at[:, :n_out].set(w2)
    b2p = jnp.zeros((1, N_PAD), b2.dtype).at[:, :n_out].set(b2)

    # Batch tiling: tile must be a multiple of 8 (sublane), batch padded up to
    # a whole number of tiles; padded rows are sliced off afterwards.
    tile_b = min(tile_b, _round_up(B, 8))
    Bp = _round_up(B, tile_b)
    if Bp != B:
        x = jnp.pad(x, ((0, Bp - B), (0, 0)))

    grid = (Bp // tile_b,)
    const = lambda shape: pl.BlockSpec(shape, lambda i: (0,) * len(shape))

    out = pl.pallas_call(
        mlp_kernel,
        out_shape=jax.ShapeDtypeStruct((Bp, N_PAD), jnp.float32),
        grid=grid,
        in_specs=[
            pl.BlockSpec((tile_b, 2), lambda i: (i, 0)),   # x: tiled over batch
            const(w0.shape), const(b0.shape),              # weights: VMEM-resident
            const(w1.shape), const(b1.shape),
            const(w2p.shape), const(b2p.shape),
        ],
        out_specs=pl.BlockSpec((tile_b, N_PAD), lambda i: (i, 0)),
        compiler_params=pltpu.CompilerParams(
            dimension_semantics=("parallel",)),
    )(x, w0, b0, w1, b1, w2p, b2p)

    return out[:B, :n_out]


def init_params(key):
    # nn.Linear(in, out): weight (out, in), bias (out,), U(-1/sqrt(in), 1/sqrt(in)).
    # Stored transposed as (in, out) for row-major matmul.
    def linear(key, fan_in, fan_out):
        kw, kb = jax.random.split(key)
        bound = 1.0 / jnp.sqrt(fan_in)
        w = jax.random.uniform(kw, (fan_in, fan_out), jnp.float32, -bound, bound)
        b = jax.random.uniform(kb, (1, fan_out), jnp.float32, -bound, bound)
        return w, b

    k0, k1, k2 = jax.random.split(key, 3)
    w0, b0 = linear(k0, 2, 64)        # layer_0: 2 -> 8*8
    w1, b1 = linear(k1, 64, 512)      # layer_1: 64 -> 8*8*8
    w2, b2 = linear(k2, 512, 2)       # layer_2: 512 -> 2
    return (w0, b0, w1, b1, w2, b2)


def reference_forward(x, params):
    w0, b0, w1, b1, w2, b2 = params
    h0 = jnp.maximum(x @ w0 + b0, 0.0)
    h1 = jnp.maximum(h0 @ w1 + b1, 0.0)
    return h1 @ w2 + b2


if __name__ == "__main__":
    key = jax.random.PRNGKey(0)
    kx, kp = jax.random.split(key)
    B = 8
    x = jax.random.normal(kx, (B, 2), jnp.float32)
    params = init_params(kp)

    out = mlp_forward(x, params)
    out = jax.block_until_ready(out)

    ref = reference_forward(x, params)
    assert out.shape == (B, 2), out.shape
    # Tolerance accounts for the bf16-operand layer_1 matmul (f32 accumulation).
    assert jnp.allclose(out, ref, atol=2e-2, rtol=2e-2), "mismatch vs reference"
    print("KERNEL_OK")
</pallas_src>

<mosaic_0001>
module attributes {stable_mosaic.version = 11 : i64} {
  func.func @mlp_kernel(%arg0: i32, %arg1: memref<8x2xf32, #tpu.memory_space<vmem>>, %arg2: memref<2x64xf32, #tpu.memory_space<vmem>>, %arg3: memref<1x64xf32, #tpu.memory_space<vmem>>, %arg4: memref<64x512xf32, #tpu.memory_space<vmem>>, %arg5: memref<1x512xf32, #tpu.memory_space<vmem>>, %arg6: memref<512x128xf32, #tpu.memory_space<vmem>>, %arg7: memref<1x128xf32, #tpu.memory_space<vmem>>, %arg8: memref<8x128xf32, #tpu.memory_space<vmem>>) attributes {dimension_semantics = [#tpu.dimension_semantics<parallel>], iteration_bounds = array<i64: 1>, scalar_prefetch = 0 : i64, scratch_operands = 0 : i64, tpu.core_type = #tpu.core_type<tc>, window_params = [{transform_indices = @transform_0, window_bounds = array<i64: 8, 2>}, {pipeline_mode = #tpu.pipeline_mode<synchronous>, transform_indices = @transform_1, window_bounds = array<i64: 2, 64>}, {pipeline_mode = #tpu.pipeline_mode<synchronous>, transform_indices = @transform_2, window_bounds = array<i64: 1, 64>}, {pipeline_mode = #tpu.pipeline_mode<synchronous>, transform_indices = @transform_3, window_bounds = array<i64: 64, 512>}, {pipeline_mode = #tpu.pipeline_mode<synchronous>, transform_indices = @transform_4, window_bounds = array<i64: 1, 512>}, {pipeline_mode = #tpu.pipeline_mode<synchronous>, transform_indices = @transform_5, window_bounds = array<i64: 512, 128>}, {pipeline_mode = #tpu.pipeline_mode<synchronous>, transform_indices = @transform_6, window_bounds = array<i64: 1, 128>}, {transform_indices = @transform_7, window_bounds = array<i64: 8, 128>}]} {
    %c0 = arith.constant 0 : index
    %c0_0 = arith.constant 0 : index
    %0 = vector.load %arg1[%c0, %c0_0] : memref<8x2xf32, #tpu.memory_space<vmem>>, vector<8x2xf32>
    %1 = vector.extract_strided_slice %0 {offsets = [0, 0], sizes = [8, 1], strides = [1, 1]} : vector<8x2xf32> to vector<8x1xf32>
    %c0_1 = arith.constant 0 : index
    %c0_2 = arith.constant 0 : index
    %2 = vector.load %arg2[%c0_1, %c0_2] : memref<2x64xf32, #tpu.memory_space<vmem>>, vector<1x64xf32>
    %3 = vector.broadcast %1 : vector<8x1xf32> to vector<8x64xf32>
    %4 = vector.broadcast %2 : vector<1x64xf32> to vector<8x64xf32>
    %5 = arith.mulf %3, %4 : vector<8x64xf32>
    %6 = vector.extract_strided_slice %0 {offsets = [0, 1], sizes = [8, 1], strides = [1, 1]} : vector<8x2xf32> to vector<8x1xf32>
    %c1 = arith.constant 1 : index
    %c0_3 = arith.constant 0 : index
    %7 = vector.load %arg2[%c1, %c0_3] : memref<2x64xf32, #tpu.memory_space<vmem>>, vector<1x64xf32>
    %8 = vector.broadcast %6 : vector<8x1xf32> to vector<8x64xf32>
    %9 = vector.broadcast %7 : vector<1x64xf32> to vector<8x64xf32>
    %10 = arith.mulf %8, %9 : vector<8x64xf32>
    %11 = arith.addf %5, %10 : vector<8x64xf32>
    %c0_4 = arith.constant 0 : index
    %c0_5 = arith.constant 0 : index
    %12 = vector.load %arg3[%c0_4, %c0_5] : memref<1x64xf32, #tpu.memory_space<vmem>>, vector<1x64xf32>
    %13 = vector.broadcast %12 : vector<1x64xf32> to vector<8x64xf32>
    %14 = arith.addf %11, %13 : vector<8x64xf32>
    %cst = arith.constant 0.000000e+00 : f32
    %15 = vector.broadcast %cst : f32 to vector<8x64xf32>
    %16 = arith.maximumf %14, %15 : vector<8x64xf32>
    %17 = arith.truncf %16 : vector<8x64xf32> to vector<8x64xbf16>
    %c0_6 = arith.constant 0 : index
    %c0_7 = arith.constant 0 : index
    %18 = vector.load %arg4[%c0_6, %c0_7] : memref<64x512xf32, #tpu.memory_space<vmem>>, vector<64x512xf32>
    %19 = arith.truncf %18 : vector<64x512xf32> to vector<64x512xbf16>
    %cst_8 = arith.constant dense<0.000000e+00> : vector<8x512xf32>
    %20 = tpu.matmul %17, %19, %cst_8 {dimension_numbers = #tpu.dot_dimension_numbers<[1], [0], [0], [1], [0, 0, 1, 1], [], []>} : vector<8x64xbf16>, vector<64x512xbf16>, vector<8x512xf32> -> vector<8x512xf32>
    %c0_9 = arith.constant 0 : index
    %c0_10 = arith.constant 0 : index
    %21 = vector.load %arg5[%c0_9, %c0_10] : memref<1x512xf32, #tpu.memory_space<vmem>>, vector<1x512xf32>
    %22 = vector.broadcast %21 : vector<1x512xf32> to vector<8x512xf32>
    %23 = arith.addf %20, %22 : vector<8x512xf32>
    %cst_11 = arith.constant 0.000000e+00 : f32
    %24 = vector.broadcast %cst_11 : f32 to vector<8x512xf32>
    %25 = arith.maximumf %23, %24 : vector<8x512xf32>
    %c0_12 = arith.constant 0 : index
    %c0_13 = arith.constant 0 : index
    %26 = vector.load %arg6[%c0_12, %c0_13] : memref<512x128xf32, #tpu.memory_space<vmem>>, vector<512x128xf32>
    %cst_14 = arith.constant dense<0.000000e+00> : vector<8x128xf32>
    %27 = tpu.matmul %25, %26, %cst_14 {dimension_numbers = #tpu.dot_dimension_numbers<[1], [0], [0], [1], [0, 0, 1, 1], [], []>} : vector<8x512xf32>, vector<512x128xf32>, vector<8x128xf32> -> vector<8x128xf32>
    %c0_15 = arith.constant 0 : index
    %c0_16 = arith.constant 0 : index
    %28 = vector.load %arg7[%c0_15, %c0_16] : memref<1x128xf32, #tpu.memory_space<vmem>>, vector<1x128xf32>
    %29 = vector.broadcast %28 : vector<1x128xf32> to vector<8x128xf32>
    %30 = arith.addf %27, %29 : vector<8x128xf32>
    %c0_17 = arith.constant 0 : index
    %c0_18 = arith.constant 0 : index
    %31 = vector.load %arg8[%c0_17, %c0_18] : memref<8x128xf32, #tpu.memory_space<vmem>>, vector<8x128xf32>
    tpu.vector_store %arg8[%c0_17, %c0_18], %30 {strides = array<i32>} : memref<8x128xf32, #tpu.memory_space<vmem>>, vector<8x128xf32>,
    return
  }
  func.func @transform_0(%arg0: i32) -> (i32, i32) {
    %c0_i32 = arith.constant 0 : i32
    %c0_i32_0 = arith.constant 0 : i32
    return %arg0, %c0_i32 : i32, i32
  }
  func.func @transform_1(%arg0: i32) -> (i32, i32) {
    %c0_i32 = arith.constant 0 : i32
    %c0_i32_0 = arith.constant 0 : i32
    %c0_i32_1 = arith.constant 0 : i32
    return %c0_i32, %c0_i32_0 : i32, i32
  }
  func.func @transform_2(%arg0: i32) -> (i32, i32) {
    %c0_i32 = arith.constant 0 : i32
    %c0_i32_0 = arith.constant 0 : i32
    %c0_i32_1 = arith.constant 0 : i32
    return %c0_i32, %c0_i32_0 : i32, i32
  }
  func.func @transform_3(%arg0: i32) -> (i32, i32) {
    %c0_i32 = arith.constant 0 : i32
    %c0_i32_0 = arith.constant 0 : i32
    %c0_i32_1 = arith.constant 0 : i32
    return %c0_i32, %c0_i32_0 : i32, i32
  }
  func.func @transform_4(%arg0: i32) -> (i32, i32) {
    %c0_i32 = arith.constant 0 : i32
    %c0_i32_0 = arith.constant 0 : i32
    %c0_i32_1 = arith.constant 0 : i32
    return %c0_i32, %c0_i32_0 : i32, i32
  }
  func.func @transform_5(%arg0: i32) -> (i32, i32) {
    %c0_i32 = arith.constant 0 : i32
    %c0_i32_0 = arith.constant 0 : i32
    %c0_i32_1 = arith.constant 0 : i32
    return %c0_i32, %c0_i32_0 : i32, i32
  }
  func.func @transform_6(%arg0: i32) -> (i32, i32) {
    %c0_i32 = arith.constant 0 : i32
    %c0_i32_0 = arith.constant 0 : i32
    %c0_i32_1 = arith.constant 0 : i32
    return %c0_i32, %c0_i32_0 : i32, i32
  }
  func.func @transform_7(%arg0: i32) -> (i32, i32) {
    %c0_i32 = arith.constant 0 : i32
    %c0_i32_0 = arith.constant 0 : i32
    return %arg0, %c0_i32 : i32, i32
  }
}

</mosaic_0001>

<llo_original>
// kernel: tpu_custom_call.1
$region0: #{tpu_custom_call.1}
  #allocation0 [shape = 'u32[]', space=smem, size = 0x4, offset = 0x4, fixed_abs, tag = 'smem constant byte address 0x4 - core index']
  #allocation1 [shape = 'u32[144,128]{1,0:T(1,128)}', space=vmem, size = 0x12000, scoped, tag = 'internal scratch']
  %s0 = inlined_call_operand.vmem [shape: f32[8,2], index: 0, kind: input, shape index: {}]
  %s1 = inlined_call_operand.vmem [shape: f32[2,64], index: 1, kind: input, shape index: {}]
  %s2 = inlined_call_operand.vmem [shape: f32[1,64], index: 2, kind: input, shape index: {}]
  %s3 = inlined_call_operand.hbm [shape: f32[64,512], index: 3, kind: input, shape index: {}]
  %s4 = inlined_call_operand.vmem [shape: f32[1,512], index: 4, kind: input, shape index: {}]
  %s5 = inlined_call_operand.hbm [shape: f32[512,128], index: 5, kind: input, shape index: {}]
  %s6 = inlined_call_operand.vmem [shape: f32[1,128], index: 6, kind: input, shape index: {}]
  %s7 = inlined_call_operand.hbm [shape: f32[8,128], index: 7, kind: output, shape index: {}]
  %s8 = sld [smem:[#allocation0]]
  $region46: #{tpu_custom_call.1} parent=0
    _
  %s10 = ssub.s32 1, %s8
  %s11 = scalar_select 0, %s10, %s8
  $region1: #{tpu_custom_call.1} parent=0
    #allocation2 [shape = 'u8[131072]{0}', space=vmem, size = 0x20000, scoped, tag = 'input window, operand 3, single buffered']
    #allocation3 [shape = 's32[1]{0}', space=sflag, size = 0x4, scoped, tag = 'scoped memory for tpu_custom_call.1']
    #allocation4 [shape = 's32[1]{0}', space=sflag, size = 0x4, scoped, tag = 'scoped memory for tpu_custom_call.1']
    #allocation5 [shape = 'u8[262144]{0}', space=vmem, size = 0x40000, scoped, tag = 'input window, operand 5, single buffered']
    #allocation6 [shape = 's32[1]{0}', space=sflag, size = 0x4, scoped, tag = 'scoped memory for tpu_custom_call.1']
    #allocation7 [shape = 'u8[4096]{0}', space=vmem, size = 0x1000, scoped, tag = 'output window, operand 0, single buffered']
    %12 = vsyncpa [#allocation3], 0
    %13 = vsyncpa [#allocation6], 0
    %14 = vsyncpa [#allocation4], 0
    // Predicated region
    $region2: #{tpu_custom_call.1} parent=1 // pred_check
      _
    $region3: #{tpu_custom_call.1} parent=1 // pred_check_branch
      %16 = sbr.rel (0) target = $region5
    $region4: #{tpu_custom_call.1} parent=1 // pred_region
      _
    $region5: #{tpu_custom_call.1} parent=1 // pred_fallthru
      _
    // Predicated region
    $region6: #{tpu_custom_call.1} parent=1 // pred_check
      _
    $region7: #{tpu_custom_call.1} parent=1 // pred_check_branch
      %18 = sbr.rel (0) target = $region9
    $region8: #{tpu_custom_call.1} parent=1 // pred_region
      _
    $region9: #{tpu_custom_call.1} parent=1 // pred_fallthru
      _
    // Predicated region
    $region10: #{tpu_custom_call.1} parent=1 // pred_check
      _
    $region11: #{tpu_custom_call.1} parent=1 // pred_check_branch
      %20 = sbr.rel (0) target = $region13
    $region12: #{tpu_custom_call.1} parent=1 // pred_region
      _
    $region13: #{tpu_custom_call.1} parent=1 // pred_fallthru
      _
    // Predicated region
    $region14: #{tpu_custom_call.1} parent=1 // pred_check
      _
    $region15: #{tpu_custom_call.1} parent=1 // pred_check_branch
      %22 = sbr.rel (0) target = $region17
    $region16: #{tpu_custom_call.1} parent=1 // pred_region
      %s24 = ssub.s32 4096, 4096
      %25 = vsyncadd [#allocation3], %s24
      %s26 = sshll.u32 [#allocation2], 4
      %s27 = int_to_ptr.vmem [resolvable:$true] %s26
      %32 = dma.hbm_to_vmem [thread:$0]  %s3, 4096, %s27, [#allocation3], 512, 512, 32
    $region17: #{tpu_custom_call.1} parent=1 // pred_fallthru
      _
    // Predicated region
    $region18: #{tpu_custom_call.1} parent=1 // pred_check
      _
    $region19: #{tpu_custom_call.1} parent=1 // pred_check_branch
      %34 = sbr.rel (0) target = $region21
    $region20: #{tpu_custom_call.1} parent=1 // pred_region
      _
    $region21: #{tpu_custom_call.1} parent=1 // pred_fallthru
      _
    // Predicated region
    $region22: #{tpu_custom_call.1} parent=1 // pred_check
      _
    $region23: #{tpu_custom_call.1} parent=1 // pred_check_branch
      %36 = sbr.rel (0) target = $region25
    $region24: #{tpu_custom_call.1} parent=1 // pred_region
      %s38 = ssub.s32 8192, 8192
      %39 = vsyncadd [#allocation6], %s38
      %s40 = sshll.u32 [#allocation5], 4
      %s41 = int_to_ptr.vmem [resolvable:$true] %s40
      %46 = dma.hbm_to_vmem [thread:$0]  %s5, 8192, %s41, [#allocation6], 128, 128, 8
    $region25: #{tpu_custom_call.1} parent=1 // pred_fallthru
      _
    // Predicated region
    $region26: #{tpu_custom_call.1} parent=1 // pred_check
      _
    $region27: #{tpu_custom_call.1} parent=1 // pred_check_branch
      %48 = sbr.rel (0) target = $region29
    $region28: #{tpu_custom_call.1} parent=1 // pred_region
      _
    $region29: #{tpu_custom_call.1} parent=1 // pred_fallthru
      _
    // Predicated region
    $region30: #{tpu_custom_call.1} parent=1 // pred_check
      _
    $region31: #{tpu_custom_call.1} parent=1 // pred_check_branch
      %50 = sbr.rel (0) target = $region33
    $region32: #{tpu_custom_call.1} parent=1 // pred_region
      %51 = dma.done [#allocation3], 4096
    $region33: #{tpu_custom_call.1} parent=1 // pred_fallthru
      _
    // Predicated region
    $region34: #{tpu_custom_call.1} parent=1 // pred_check
      _
    $region35: #{tpu_custom_call.1} parent=1 // pred_check_branch
      %53 = sbr.rel (0) target = $region37
    $region36: #{tpu_custom_call.1} parent=1 // pred_region
      %54 = dma.done [#allocation6], 8192
    $region37: #{tpu_custom_call.1} parent=1 // pred_fallthru
      _
    %v56 = vld [vmem:[%s0] sm:$0xff]
    %v57 = vld [vmem:[%s1] sm:$0x1]
    %59 = vset.pattern.permute.xlu0 0
    %60 = vperm.xlu0 %59, %v56
    %v61 = vpop.permute.xlu0 %60
    %v63 = vlaneseq
    %v64 = vshrl.u32 %v63, 7
    %v65 = vsub.s32 0, %v64
    %v66 = vrot.slane %v57, %v65
    %v67 = vmul.f32 %v61, %v66
    %v68 = vld [vmem:[%s1 + $0x1] sm:$0x1]
    %69 = vset.pattern.permute.xlu0 1
    %70 = vperm.xlu0 %69, %v56
    %v71 = vpop.permute.xlu0 %70
    %v73 = vlaneseq
    %v74 = vshrl.u32 %v73, 7
    %v75 = vsub.s32 0, %v74
    %v76 = vrot.slane %v68, %v75
    %v77 = vmul.f32 %v71, %v76
    %v78 = vadd.f32 %v67, %v77
    %v79 = vld [vmem:[%s2] sm:$0x1]
    %v81 = vlaneseq
    %v82 = vshrl.u32 %v81, 7
    %v83 = vsub.s32 0, %v82
    %v84 = vrot.slane %v79, %v83
    %v86 = vadd.f32 %v78, %v84
    %v87 = vmax.f32 %v86, 0.0
    %v88 = vpack.c.bf16 %v87, %v87
    %v89 = vld [vmem:[#allocation2] sm:$0xff]
    %v90 = vld [vmem:[#allocation2 + $0x8] sm:$0xff]
    %v91 = vld [vmem:[#allocation2 + $0x10] sm:$0xff]
    %v92 = vld [vmem:[#allocation2 + $0x18] sm:$0xff]
    %v93 = vld [vmem:[#allocation2 + $0x20] sm:$0xff]
    %v94 = vld [vmem:[#allocation2 + $0x28] sm:$0xff]
    %v95 = vld [vmem:[#allocation2 + $0x30] sm:$0xff]
    %v96 = vld [vmem:[#allocation2 + $0x38] sm:$0xff]
    %v97 = vld [vmem:[#allocation2 + $0x40] sm:$0xff]
    %v98 = vld [vmem:[#allocation2 + $0x48] sm:$0xff]
    %v99 = vld [vmem:[#allocation2 + $0x50] sm:$0xff]
    %v100 = vld [vmem:[#allocation2 + $0x58] sm:$0xff]
    %v101 = vld [vmem:[#allocation2 + $0x60] sm:$0xff]
    %v102 = vld [vmem:[#allocation2 + $0x68] sm:$0xff]
    %v103 = vld [vmem:[#allocation2 + $0x70] sm:$0xff]
    %v104 = vld [vmem:[#allocation2 + $0x78] sm:$0xff]
    %v105 = vld [vmem:[#allocation2 + $0x80] sm:$0xff]
    %v106 = vld [vmem:[#allocation2 + $0x88] sm:$0xff]
    %v107 = vld [vmem:[#allocation2 + $0x90] sm:$0xff]
    %v108 = vld [vmem:[#allocation2 + $0x98] sm:$0xff]
    %v109 = vld [vmem:[#allocation2 + $0xa0] sm:$0xff]
    %v110 = vld [vmem:[#allocation2 + $0xa8] sm:$0xff]
    %v111 = vld [vmem:[#allocation2 + $0xb0] sm:$0xff]
    %v112 = vld [vmem:[#allocation2 + $0xb8] sm:$0xff]
    %v113 = vld [vmem:[#allocation2 + $0xc0] sm:$0xff]
    %v114 = vld [vmem:[#allocation2 + $0xc8] sm:$0xff]
    %v115 = vld [vmem:[#allocation2 + $0xd0] sm:$0xff]
    %v116 = vld [vmem:[#allocation2 + $0xd8] sm:$0xff]
    %v117 = vld [vmem:[#allocation2 + $0xe0] sm:$0xff]
    %v118 = vld [vmem:[#allocation2 + $0xe8] sm:$0xff]
    %v119 = vld [vmem:[#allocation2 + $0xf0] sm:$0xff]
    %v120 = vld [vmem:[#allocation2 + $0xf8] sm:$0xff]
    %v121 = vpack.c.bf16 %v93, %v89
    %v122 = vpack.c.bf16 %v94, %v90
    %v123 = vpack.c.bf16 %v95, %v91
    %v124 = vpack.c.bf16 %v96, %v92
    %v125 = vpack.c.bf16 %v101, %v97
    %v126 = vpack.c.bf16 %v102, %v98
    %v127 = vpack.c.bf16 %v103, %v99
    %v128 = vpack.c.bf16 %v104, %v100
    %v129 = vpack.c.bf16 %v109, %v105
    %v130 = vpack.c.bf16 %v110, %v106
    %v131 = vpack.c.bf16 %v111, %v107
    %v132 = vpack.c.bf16 %v112, %v108
    %v133 = vpack.c.bf16 %v117, %v113
    %v134 = vpack.c.bf16 %v118, %v114
    %v135 = vpack.c.bf16 %v119, %v115
    %v136 = vpack.c.bf16 %v120, %v116
    %v137 = vld [vmem:[%s4] sm:$0xf]
    %v139 = vlaneseq
    %v140 = vshrl.u32 %v139, 7
    %v141 = vsub.s32 0, %v140
    %v142 = vrot.slane %v137, %v141
    %v143 = vlaneseq
    %v144 = vshrl.u32 %v143, 7
    %v145 = vsub.s32 1, %v144
    %v146 = vrot.slane %v137, %v145
    %v147 = vlaneseq
    %v148 = vshrl.u32 %v147, 7
    %v149 = vsub.s32 2, %v148
    %v150 = vrot.slane %v137, %v149
    %v151 = vlaneseq
    %v152 = vshrl.u32 %v151, 7
    %v153 = vsub.s32 3, %v152
    %v154 = vrot.slane %v137, %v153
    %vm159 = vcmask 523264
    %v161 = vsel %vm159, %v88, 0
    %163 = vmatprep.subr.bf16.mxu0 %v122
    %164 = vmatpush1.bf16.msra.mxu0 %v121
    %165 = vmatprep.subr.bf16.mxu0 %v126
    %166 = vmatpush1.bf16.msra.mxu0 %v125
    %167 = vmatprep.subr.bf16.mxu0 %v130
    %168 = vmatpush1.bf16.msra.mxu0 %v129
    %169 = vmatprep.subr.bf16.mxu0 %v134
    %170 = vmatpush1.bf16.msra.mxu0 %v133
    %171 = vmatprep.subr.bf16.mxu0 0
    %172 = vmatpush1.bf16.msra.mxu0 0
    %173 = vmatprep.subr.bf16.mxu0 0
    %174 = vmatpush1.bf16.msra.mxu0 0
    %175 = vmatprep.subr.bf16.mxu0 0
    %176 = vmatpush1.bf16.msra.mxu0 0
    %177 = vmatprep.subr.bf16.mxu0 0
    %178 = vmatpush1.bf16.msra.mxu0 0
    %179 = vmatprep.subr.bf16.mxu0 0
    %180 = vmatpush1.bf16.msra.mxu0 0
    %181 = vmatprep.subr.bf16.mxu0 0
    %182 = vmatpush1.bf16.msra.mxu0 0
    %183 = vmatprep.subr.bf16.mxu0 0
    %184 = vmatpush1.bf16.msra.mxu0 0
    %185 = vmatprep.subr.bf16.mxu0 0
    %186 = vmatpush1.bf16.msra.mxu0 0
    %187 = vmatprep.subr.bf16.mxu0 0
    %188 = vmatpush1.bf16.msra.mxu0 0
    %189 = vmatprep.subr.bf16.mxu0 0
    %190 = vmatpush1.bf16.msra.mxu0 0
    %191 = vmatprep.subr.bf16.mxu0 0
    %192 = vmatpush1.bf16.msra.mxu0 0
    %193 = vmatprep.subr.bf16.mxu0 0
    %194 = vmatpush1.bf16.msra.mxu0 0
    %195 = vmatprep.mubr.bf16.mxu0 0
    %196 = vmatmul.mubr.bf16.gmra.mrb[0].mxu0 %v161
    %v197 = vpop.f32.mrb[0].mxu0
    %v198 = vadd.f32 %v142, %v197
    %v199 = vpop.f32.mrb[0].mxu0
    %v200 = vadd.f32 %v146, %v199
    %v201 = vpop.f32.mrb[0].mxu0
    %v202 = vpop.f32.mrb[0].mxu0
    %203 = vdwg.mxu0
    %204 = vmatprep.subr.bf16.mxu0 %v124
    %205 = vmatpush1.bf16.msra.mxu0 %v123
    %206 = vmatprep.subr.bf16.mxu0 %v128
    %207 = vmatpush1.bf16.msra.mxu0 %v127
    %208 = vmatprep.subr.bf16.mxu0 %v132
    %209 = vmatpush1.bf16.msra.mxu0 %v131
    %210 = vmatprep.subr.bf16.mxu0 %v136
    %211 = vmatpush1.bf16.msra.mxu0 %v135
    %212 = vmatprep.subr.bf16.mxu0 0
    %213 = vmatpush1.bf16.msra.mxu0 0
    %214 = vmatprep.subr.bf16.mxu0 0
    %215 = vmatpush1.bf16.msra.mxu0 0
    %216 = vmatprep.subr.bf16.mxu0 0
    %217 = vmatpush1.bf16.msra.mxu0 0
    %218 = vmatprep.subr.bf16.mxu0 0
    %219 = vmatpush1.bf16.msra.mxu0 0
    %220 = vmatprep.subr.bf16.mxu0 0
    %221 = vmatpush1.bf16.msra.mxu0 0
    %222 = vmatprep.subr.bf16.mxu0 0
    %223 = vmatpush1.bf16.msra.mxu0 0
    %224 = vmatprep.subr.bf16.mxu0 0
    %225 = vmatpush1.bf16.msra.mxu0 0
    %226 = vmatprep.subr.bf16.mxu0 0
    %227 = vmatpush1.bf16.msra.mxu0 0
    %228 = vmatprep.subr.bf16.mxu0 0
    %229 = vmatpush1.bf16.msra.mxu0 0
    %230 = vmatprep.subr.bf16.mxu0 0
    %231 = vmatpush1.bf16.msra.mxu0 0
    %232 = vmatprep.subr.bf16.mxu0 0
    %233 = vmatpush1.bf16.msra.mxu0 0
    %234 = vmatprep.subr.bf16.mxu0 0
    %235 = vmatpush1.bf16.msra.mxu0 0
    %236 = vmatprep.mubr.bf16.mxu0 0
    %237 = vmatmul.mubr.bf16.gmra.mrb[0].mxu0 %v161
    %v238 = vpop.f32.mrb[0].mxu0
    %v239 = vadd.f32 %v150, %v238
    %v240 = vpop.f32.mrb[0].mxu0
    %v241 = vadd.f32 %v154, %v240
    %v242 = vpop.f32.mrb[0].mxu0
    %v243 = vpop.f32.mrb[0].mxu0
    %244 = vdwg.mxu0
    %v245 = vmax.f32 %v198, 0.0
    %v246 = vmax.f32 %v200, 0.0
    %v247 = vmax.f32 %v239, 0.0
    %v248 = vmax.f32 %v241, 0.0
    %v249 = vld [vmem:[#allocation5] sm:$0xff]
    %v250 = vld [vmem:[#allocation5 + $0x8] sm:$0xff]
    %v251 = vld [vmem:[#allocation5 + $0x10] sm:$0xff]
    %v252 = vld [vmem:[#allocation5 + $0x18] sm:$0xff]
    %v253 = vld [vmem:[#allocation5 + $0x20] sm:$0xff]
    %v254 = vld [vmem:[#allocation5 + $0x28] sm:$0xff]
    %v255 = vld [vmem:[#allocation5 + $0x30] sm:$0xff]
    %v256 = vld [vmem:[#allocation5 + $0x38] sm:$0xff]
    %v257 = vld [vmem:[#allocation5 + $0x40] sm:$0xff]
    %v258 = vld [vmem:[#allocation5 + $0x48] sm:$0xff]
    %v259 = vld [vmem:[#allocation5 + $0x50] sm:$0xff]
    %v260 = vld [vmem:[#allocation5 + $0x58] sm:$0xff]
    %v261 = vld [vmem:[#allocation5 + $0x60] sm:$0xff]
    %v262 = vld [vmem:[#allocation5 + $0x68] sm:$0xff]
    %v263 = vld [vmem:[#allocation5 + $0x70] sm:$0xff]
    %v264 = vld [vmem:[#allocation5 + $0x78] sm:$0xff]
    %v265 = vld [vmem:[#allocation5 + $0x80] sm:$0xff]
    %v266 = vld [vmem:[#allocation5 + $0x88] sm:$0xff]
    %v267 = vld [vmem:[#allocation5 + $0x90] sm:$0xff]
    %v268 = vld [vmem:[#allocation5 + $0x98] sm:$0xff]
    %v269 = vld [vmem:[#allocation5 + $0xa0] sm:$0xff]
    %v270 = vld [vmem:[#allocation5 + $0xa8] sm:$0xff]
    %v271 = vld [vmem:[#allocation5 + $0xb0] sm:$0xff]
    %v272 = vld [vmem:[#allocation5 + $0xb8] sm:$0xff]
    %v273 = vld [vmem:[#allocation5 + $0xc0] sm:$0xff]
    %v274 = vld [vmem:[#allocation5 + $0xc8] sm:$0xff]
    %v275 = vld [vmem:[#allocation5 + $0xd0] sm:$0xff]
    %v276 = vld [vmem:[#allocation5 + $0xd8] sm:$0xff]
    %v277 = vld [vmem:[#allocation5 + $0xe0] sm:$0xff]
    %v278 = vld [vmem:[#allocation5 + $0xe8] sm:$0xff]
    %v279 = vld [vmem:[#allocation5 + $0xf0] sm:$0xff]
    %v280 = vld [vmem:[#allocation5 + $0xf8] sm:$0xff]
    %v281 = vld [vmem:[#allocation5 + $0x100] sm:$0xff]
    %v282 = vld [vmem:[#allocation5 + $0x108] sm:$0xff]
    %v283 = vld [vmem:[#allocation5 + $0x110] sm:$0xff]
    %v284 = vld [vmem:[#allocation5 + $0x118] sm:$0xff]
    %v285 = vld [vmem:[#allocation5 + $0x120] sm:$0xff]
    %v286 = vld [vmem:[#allocation5 + $0x128] sm:$0xff]
    %v287 = vld [vmem:[#allocation5 + $0x130] sm:$0xff]
    %v288 = vld [vmem:[#allocation5 + $0x138] sm:$0xff]
    %v289 = vld [vmem:[#allocation5 + $0x140] sm:$0xff]
    %v290 = vld [vmem:[#allocation5 + $0x148] sm:$0xff]
    %v291 = vld [vmem:[#allocation5 + $0x150] sm:$0xff]
    %v292 = vld [vmem:[#allocation5 + $0x158] sm:$0xff]
    %v293 = vld [vmem:[#allocation5 + $0x160] sm:$0xff]
    %v294 = vld [vmem:[#allocation5 + $0x168] sm:$0xff]
    %v295 = vld [vmem:[#allocation5 + $0x170] sm:$0xff]
    %v296 = vld [vmem:[#allocation5 + $0x178] sm:$0xff]
    %v297 = vld [vmem:[#allocation5 + $0x180] sm:$0xff]
    %v298 = vld [vmem:[#allocation5 + $0x188] sm:$0xff]
    %v299 = vld [vmem:[#allocation5 + $0x190] sm:$0xff]
    %v300 = vld [vmem:[#allocation5 + $0x198] sm:$0xff]
    %v301 = vld [vmem:[#allocation5 + $0x1a0] sm:$0xff]
    %v302 = vld [vmem:[#allocation5 + $0x1a8] sm:$0xff]
    %v303 = vld [vmem:[#allocation5 + $0x1b0] sm:$0xff]
    %v304 = vld [vmem:[#allocation5 + $0x1b8] sm:$0xff]
    %v305 = vld [vmem:[#allocation5 + $0x1c0] sm:$0xff]
    %v306 = vld [vmem:[#allocation5 + $0x1c8] sm:$0xff]
    %v307 = vld [vmem:[#allocation5 + $0x1d0] sm:$0xff]
    %v308 = vld [vmem:[#allocation5 + $0x1d8] sm:$0xff]
    %v309 = vld [vmem:[#allocation5 + $0x1e0] sm:$0xff]
    %v310 = vld [vmem:[#allocation5 + $0x1e8] sm:$0xff]
    %v311 = vld [vmem:[#allocation5 + $0x1f0] sm:$0xff]
    %v312 = vld [vmem:[#allocation5 + $0x1f8] sm:$0xff]
    %v313 = vld [vmem:[%s6] sm:$0x1]
    %v315 = vlaneseq
    %v316 = vshrl.u32 %v315, 7
    %v317 = vsub.s32 0, %v316
    %v318 = vrot.slane %v313, %v317
    %320 = vmatprep.subr.mxu0 0.0
    %321 = vmatpush1.msra.mxu0 %v249
    %322 = vmatprep.subr.mxu0 0.0
    %323 = vmatpush1.msra.mxu0 %v250
    %324 = vmatprep.subr.mxu0 0.0
    %325 = vmatpush1.msra.mxu0 %v251
    %326 = vmatprep.subr.mxu0 0.0
    %327 = vmatpush1.msra.mxu0 %v252
    %328 = vmatprep.subr.mxu0 0.0
    %329 = vmatpush1.msra.mxu0 %v253
    %330 = vmatprep.subr.mxu0 0.0
    %331 = vmatpush1.msra.mxu0 %v254
    %332 = vmatprep.subr.mxu0 0.0
    %333 = vmatpush1.msra.mxu0 %v255
    %334 = vmatprep.subr.mxu0 0.0
    %335 = vmatpush1.msra.mxu0 %v256
    %336 = vmatprep.subr.mxu0 0.0
    %337 = vmatpush1.msra.mxu0 %v257
    %338 = vmatprep.subr.mxu0 0.0
    %339 = vmatpush1.msra.mxu0 %v258
    %340 = vmatprep.subr.mxu0 0.0
    %341 = vmatpush1.msra.mxu0 %v259
    %342 = vmatprep.subr.mxu0 0.0
    %343 = vmatpush1.msra.mxu0 %v260
    %344 = vmatprep.subr.mxu0 0.0
    %345 = vmatpush1.msra.mxu0 %v261
    %346 = vmatprep.subr.mxu0 0.0
    %347 = vmatpush1.msra.mxu0 %v262
    %348 = vmatprep.subr.mxu0 0.0
    %349 = vmatpush1.msra.mxu0 %v263
    %350 = vmatprep.subr.mxu0 0.0
    %351 = vmatpush1.msra.mxu0 %v264
    %352 = vmatprep.subr.mxu0 0.0
    %353 = vmatpush1.msra.mxu0 %v265
    %354 = vmatprep.subr.mxu0 0.0
    %355 = vmatpush1.msra.mxu0 %v266
    %356 = vmatprep.subr.mxu0 0.0
    %357 = vmatpush1.msra.mxu0 %v267
    %358 = vmatprep.subr.mxu0 0.0
    %359 = vmatpush1.msra.mxu0 %v268
    %360 = vmatprep.subr.mxu0 0.0
    %361 = vmatpush1.msra.mxu0 %v269
    %362 = vmatprep.subr.mxu0 0.0
    %363 = vmatpush1.msra.mxu0 %v270
    %364 = vmatprep.subr.mxu0 0.0
    %365 = vmatpush1.msra.mxu0 %v271
    %366 = vmatprep.subr.mxu0 0.0
    %367 = vmatpush1.msra.mxu0 %v272
    %368 = vmatprep.subr.mxu0 0.0
    %369 = vmatpush1.msra.mxu0 %v273
    %370 = vmatprep.subr.mxu0 0.0
    %371 = vmatpush1.msra.mxu0 %v274
    %372 = vmatprep.subr.mxu0 0.0
    %373 = vmatpush1.msra.mxu0 %v275
    %374 = vmatprep.subr.mxu0 0.0
    %375 = vmatpush1.msra.mxu0 %v276
    %376 = vmatprep.subr.mxu0 0.0
    %377 = vmatpush1.msra.mxu0 %v277
    %378 = vmatprep.subr.mxu0 0.0
    %379 = vmatpush1.msra.mxu0 %v278
    %380 = vmatprep.subr.mxu0 0.0
    %381 = vmatpush1.msra.mxu0 %v279
    %382 = vmatprep.subr.mxu0 0.0
    %383 = vmatpush1.msra.mxu0 %v280
    %384 = vmatprep.mubr.f32.mxu0 %v246
    %385 = vmatmul.mubr.f32.gmra.mrb[0].mxu0 %v245
    %v386 = vpop.f32.mrb[0].mxu0
    %v387 = vadd.f32 %v318, %v386
    %v388 = vpop.f32.mrb[0].mxu0
    %389 = vdwg.mxu0
    %390 = vmatprep.subr.mxu0 0.0
    %391 = vmatpush1.msra.mxu0 %v281
    %392 = vmatprep.subr.mxu0 0.0
    %393 = vmatpush1.msra.mxu0 %v282
    %394 = vmatprep.subr.mxu0 0.0
    %395 = vmatpush1.msra.mxu0 %v283
    %396 = vmatprep.subr.mxu0 0.0
    %397 = vmatpush1.msra.mxu0 %v284
    %398 = vmatprep.subr.mxu0 0.0
    %399 = vmatpush1.msra.mxu0 %v285
    %400 = vmatprep.subr.mxu0 0.0
    %401 = vmatpush1.msra.mxu0 %v286
    %402 = vmatprep.subr.mxu0 0.0
    %403 = vmatpush1.msra.mxu0 %v287
    %404 = vmatprep.subr.mxu0 0.0
    %405 = vmatpush1.msra.mxu0 %v288
    %406 = vmatprep.subr.mxu0 0.0
    %407 = vmatpush1.msra.mxu0 %v289
    %408 = vmatprep.subr.mxu0 0.0
    %409 = vmatpush1.msra.mxu0 %v290
    %410 = vmatprep.subr.mxu0 0.0
    %411 = vmatpush1.msra.mxu0 %v291
    %412 = vmatprep.subr.mxu0 0.0
    %413 = vmatpush1.msra.mxu0 %v292
    %414 = vmatprep.subr.mxu0 0.0
    %415 = vmatpush1.msra.mxu0 %v293
    %416 = vmatprep.subr.mxu0 0.0
    %417 = vmatpush1.msra.mxu0 %v294
    %418 = vmatprep.subr.mxu0 0.0
    %419 = vmatpush1.msra.mxu0 %v295
    %420 = vmatprep.subr.mxu0 0.0
    %421 = vmatpush1.msra.mxu0 %v296
    %422 = vmatprep.subr.mxu0 0.0
    %423 = vmatpush1.msra.mxu0 %v297
    %424 = vmatprep.subr.mxu0 0.0
    %425 = vmatpush1.msra.mxu0 %v298
    %426 = vmatprep.subr.mxu0 0.0
    %427 = vmatpush1.msra.mxu0 %v299
    %428 = vmatprep.subr.mxu0 0.0
    %429 = vmatpush1.msra.mxu0 %v300
    %430 = vmatprep.subr.mxu0 0.0
    %431 = vmatpush1.msra.mxu0 %v301
    %432 = vmatprep.subr.mxu0 0.0
    %433 = vmatpush1.msra.mxu0 %v302
    %434 = vmatprep.subr.mxu0 0.0
    %435 = vmatpush1.msra.mxu0 %v303
    %436 = vmatprep.subr.mxu0 0.0
    %437 = vmatpush1.msra.mxu0 %v304
    %438 = vmatprep.subr.mxu0 0.0
    %439 = vmatpush1.msra.mxu0 %v305
    %440 = vmatprep.subr.mxu0 0.0
    %441 = vmatpush1.msra.mxu0 %v306
    %442 = vmatprep.subr.mxu0 0.0
    %443 = vmatpush1.msra.mxu0 %v307
    %444 = vmatprep.subr.mxu0 0.0
    %445 = vmatpush1.msra.mxu0 %v308
    %446 = vmatprep.subr.mxu0 0.0
    %447 = vmatpush1.msra.mxu0 %v309
    %448 = vmatprep.subr.mxu0 0.0
    %449 = vmatpush1.msra.mxu0 %v310
    %450 = vmatprep.subr.mxu0 0.0
    %451 = vmatpush1.msra.mxu0 %v311
    %452 = vmatprep.subr.mxu0 0.0
    %453 = vmatpush1.msra.mxu0 %v312
    %454 = vmatprep.mubr.f32.mxu0 %v248
    %455 = vmatmul.mubr.f32.gmra.mrb[0].mxu0 %v247
    %v456 = vpop.f32.mrb[0].mxu0
    %v457 = vadd.f32 %v387, %v456
    %v458 = vpop.f32.mrb[0].mxu0
    %459 = vdwg.mxu0
    %460 = vst [vmem:[#allocation7] sm:$0xff] %v457
    // Predicated region
    $region38: #{tpu_custom_call.1} parent=1 // pred_check
      _
    $region39: #{tpu_custom_call.1} parent=1 // pred_check_branch
      %462 = sbr.rel (0) target = $region41
    $region40: #{tpu_custom_call.1} parent=1 // pred_region
      %s464 = ssub.s32 128, 128
      %465 = vsyncadd [#allocation4], %s464
      %s467 = sshll.u32 [#allocation7], 4
      %s468 = int_to_ptr.vmem [resolvable:$true] %s467
      %470 = dma.vmem_to_hbm [thread:$0]  %s468, 128, %s7, [#allocation4]
    $region41: #{tpu_custom_call.1} parent=1 // pred_fallthru
      _
    // Predicated region
    $region42: #{tpu_custom_call.1} parent=1 // pred_check
      _
    $region43: #{tpu_custom_call.1} parent=1 // pred_check_branch
      %472 = sbr.rel (0) target = $region45
    $region44: #{tpu_custom_call.1} parent=1 // pred_region
      %473 = dma.done [#allocation4], 128
    $region45: #{tpu_custom_call.1} parent=1 // pred_fallthru
      _
    %474 = vsyncpa [#allocation3], 1
    %475 = vsyncpa [#allocation6], 1
    %476 = vsyncpa [#allocation4], 1

</llo_original>
